<compile_context>
chip_gen: v7x
topology: tpu7x:2x2x1
jax: 0.10.0
libtpu: 0.0.40
codegen_flags: <defaults>
</compile_context>

<pallas_src>
import jax
import jax.numpy as jnp
from jax.experimental import pallas as pl
from jax.experimental.pallas import tpu as pltpu

_LANE = 128
_SMALL_C = 8  # channel mix done on the VPU at/below this many channels


def _round_up(x, m):
    return (x + m - 1) // m * m


def _cdiv(a, b):
    return -(-a // b)


def _vmem_budget_bytes():
    """Generation-aware VMEM budget (half of physical, capped at 64 MiB)."""
    try:
        cap = int(pltpu.get_tpu_info().vmem_capacity_bytes)
    except Exception:  # conservative fallback ~ v7x-sized
        cap = 64 * 1024 * 1024
    return int(min(cap // 2, 64 * 1024 * 1024))


def _channel_mix(w, x):
    """(Co, C) x (C, T) -> (Co, T) with f32 accumulation.

    Tiny C: unrolled VPU broadcast-FMAs (the MXU would be ~0.1% fed and the
    sub-8-sublane result layout wastes vregs/stores).  Otherwise: MXU matmul
    in the operands' native dtype with f32 accumulation.
    """
    c_in = x.shape[0]
    if c_in <= _SMALL_C:
        acc = w[:, 0:1].astype(jnp.float32) * x[0:1, :].astype(jnp.float32)
        for c in range(1, c_in):
            acc = acc + (w[:, c:c + 1].astype(jnp.float32)
                         * x[c:c + 1, :].astype(jnp.float32))
        return acc
    return jnp.dot(w, x, preferred_element_type=jnp.float32)


def _fused_kernel(x_ref, w_ref, b_ref, o_ref):
    # x_ref: (C, HW) native dtype; w_ref: (C, C) native; b_ref: (C, 1) f32.
    x = x_ref[...]
    w = w_ref[...]
    m = jnp.mean(x.astype(jnp.float32), axis=-1, keepdims=True)        # (C, 1)
    col = b_ref[...] + m - _channel_mix(w, m)                           # (C, 1)
    y = _channel_mix(w, x)                                              # (C, HW) f32
    o_ref[...] = (y + col).astype(o_ref.dtype)


def _tiled_kernel(x_ref, w_ref, c_ref, o_ref):
    # x_ref: (C, T); w_ref: (TCo, C); c_ref: (TCo, 1) f32; o_ref: (TCo, T).
    y = _channel_mix(w_ref[...], x_ref[...])
    o_ref[...] = (y + c_ref[...]).astype(o_ref.dtype)


def avgpool2d_adapter(x_nchw, weight, bias, *, force_tiled=False,
                      spatial_tile=None):
    """x_nchw: (N, C, H, W); weight: (C, C) from Conv2d 1x1; bias: (C,)."""
    N, C, H, W = x_nchw.shape
    HW = H * W
    in_dtype = x_nchw.dtype
    itemsize = jnp.dtype(in_dtype).itemsize
    budget = _vmem_budget_bytes()

    # dtype policy: the channel-mix weight matches x (native full-rate MXU
    # path, e.g. bf16xbf16 -> f32 accumulate); mean / bias / fold stay f32.
    w_native = weight.astype(in_dtype)
    w_f32 = weight.astype(jnp.float32)
    b_f32 = bias.astype(jnp.float32)

    x_flat = x_nchw.reshape(N, C, HW)

    # ---------------- fused single-pass path (slab resident in VMEM) -------
    hw_l = _round_up(HW, _LANE)
    fused_bytes = (2 * C * hw_l * itemsize          # x tile, double-buffered
                   + 2 * C * hw_l * itemsize        # out tile, double-buffered
                   + C * C * (itemsize + 4)         # resident W + f32 matvec upcast
                   + 2 * C * hw_l * 4               # f32 mean upcast + matmul temp
                   + 4 * C * 4)                     # mean / fold columns
    use_fused = (not force_tiled) and (fused_bytes * 12) // 10 <= budget

    if use_fused:
        cost = pl.CostEstimate(
            flops=2 * N * C * C * HW + 3 * N * C * HW,
            transcendentals=0,
            bytes_accessed=(2 * N * C * HW * itemsize + C * C * itemsize
                            + C * 4))
        out_flat = pl.pallas_call(
            _fused_kernel,
            out_shape=jax.ShapeDtypeStruct((N, C, HW), in_dtype),
            grid_spec=pltpu.PrefetchScalarGridSpec(
                num_scalar_prefetch=0,
                grid=(N,),
                in_specs=[
                    pl.BlockSpec((None, C, HW), lambda n: (n, 0, 0)),
                    # constant index_map -> resident; single buffer is enough
                    pl.BlockSpec((C, C), lambda n: (0, 0),
                                 pipeline_mode=pl.Buffered(1)),
                    pl.BlockSpec((C, 1), lambda n: (0, 0),
                                 pipeline_mode=pl.Buffered(1)),
                ],
                out_specs=pl.BlockSpec((None, C, HW), lambda n: (n, 0, 0)),
            ),
            compiler_params=pltpu.CompilerParams(
                dimension_semantics=("parallel",),
                vmem_limit_bytes=budget),
            cost_estimate=cost,
        )(x_flat, w_native, b_f32.reshape(C, 1))
        return out_flat.reshape(N, C, H, W)

    # ---------------- tiled fallback: wrapper-side mean + fold -------------
    # (second HBM read of x; only taken when the slab does not fit VMEM)
    m = jnp.mean(x_flat.astype(jnp.float32), axis=-1)                   # (N, C)
    col = b_f32[None, :] + m - jnp.einsum('oc,nc->no', w_f32, m)         # (N, C)
    col = col.reshape(N, C, 1)

    # Output-channel tiling keeps W / out / f32 accumulator bounded for big C.
    # TODO(synk): if C grows so large that even a (256, C) weight stripe is a
    # problem, add a K ("arbitrary") grid axis with pl.when-init accumulation.
    if C <= 512:
        t_co, n_co = C, 1
    else:
        t_co = 256
        n_co = _cdiv(C, t_co)

    # Spatial tile from a byte budget (~2 MiB per x tile), 128-lane multiple.
    if spatial_tile is not None:
        T = spatial_tile
    else:
        T = max(_LANE, ((2 * 1024 * 1024) // (C * itemsize)) // _LANE * _LANE)
        T = min(T, _round_up(HW, _LANE))

        def footprint(t):
            return (2 * C * t * itemsize                              # x, 2 bufs
                    + 2 * t_co * t * itemsize                         # out, 2 bufs
                    + (1 if n_co == 1 else 2) * t_co * C * itemsize   # weight
                    + 2 * t_co * 4                                    # fold column
                    + t_co * t * 4)                                   # f32 temp

        while T > _LANE and (footprint(T) * 12) // 10 > budget:
            T = max(_LANE, (T // 2) // _LANE * _LANE)
    n_hw = _cdiv(HW, T)

    if n_co == 1:
        # Resident weight: constant index_map, no double-buffering needed.
        w_spec = pl.BlockSpec((C, C), lambda n, h, c: (0, 0),
                              pipeline_mode=pl.Buffered(1))
    else:
        w_spec = pl.BlockSpec((t_co, C), lambda n, h, c: (c, 0))

    cost = pl.CostEstimate(
        flops=2 * N * C * C * HW,
        transcendentals=0,
        bytes_accessed=(N * C * HW * itemsize
                        + (n_hw if n_co > 1 else 1) * C * C * itemsize
                        + N * C * 4
                        + N * C * HW * itemsize))

    out_flat = pl.pallas_call(
        _tiled_kernel,
        out_shape=jax.ShapeDtypeStruct((N, C, HW), in_dtype),
        grid_spec=pltpu.PrefetchScalarGridSpec(
            num_scalar_prefetch=0,
            # co innermost: the x tile index is unchanged across the co sweep,
            # so it is not re-DMA'd; W stripes stream underneath the matmul.
            grid=(N, n_hw, n_co),
            in_specs=[
                pl.BlockSpec((None, C, T), lambda n, h, c: (n, 0, h)),
                w_spec,
                pl.BlockSpec((None, t_co, 1), lambda n, h, c: (n, c, 0)),
            ],
            out_specs=pl.BlockSpec((None, t_co, T), lambda n, h, c: (n, c, h)),
        ),
        compiler_params=pltpu.CompilerParams(
            dimension_semantics=("parallel", "parallel", "parallel"),
            vmem_limit_bytes=budget),
        cost_estimate=cost,
    )(x_flat, w_native, col)
    return out_flat.reshape(N, C, H, W)


def _reference(x_nchw, weight, bias):
    # Pure-JAX reference mirroring the PyTorch module.
    m = jnp.mean(x_nchw, axis=(2, 3), keepdims=True)                    # (N,C,1,1)
    y = jnp.einsum('oc,nchw->nohw', weight, x_nchw - m)
    return y + bias[None, :, None, None] + m


if __name__ == "__main__":
    key = jax.random.PRNGKey(0)
    kx, kw, kb, kx2 = jax.random.split(key, 4)

    N, C, H, W = 2, 4, 16, 16
    x = jax.random.normal(kx, (N, C, H, W), dtype=jnp.float32)

    # Deterministic "operation" parameters (Conv2d(C, C, kernel_size=1)).
    weight = jax.random.normal(kw, (C, C), dtype=jnp.float32) * 0.1
    bias = jax.random.normal(kb, (C,), dtype=jnp.float32) * 0.1

    ref = _reference(x, weight, bias)

    # 1) fused single-pass path (per-batch slab fits VMEM at this size).
    out = jax.block_until_ready(avgpool2d_adapter(x, weight, bias))
    assert out.shape == (N, C, H, W)
    # Algebraic fold reassociates fp ops vs. the literal formulation.
    assert jnp.allclose(out, ref, atol=1e-4, rtol=1e-4), "fused path mismatch"

    # 2) tiled fallback path (forced), tile exactly divides HW.
    out_t = jax.block_until_ready(
        avgpool2d_adapter(x, weight, bias, force_tiled=True, spatial_tile=128))
    assert jnp.allclose(out_t, ref, atol=1e-4, rtol=1e-4), "tiled path mismatch"

    # 3) tiled path with a ragged spatial tail (HW=144, tile=128 -> masked tail).
    x2 = jax.random.normal(kx2, (1, C, 12, 12), dtype=jnp.float32)
    ref2 = _reference(x2, weight, bias)
    out2 = jax.block_until_ready(
        avgpool2d_adapter(x2, weight, bias, force_tiled=True, spatial_tile=128))
    assert jnp.allclose(out2, ref2, atol=1e-4, rtol=1e-4), "ragged tail mismatch"

    print("KERNEL_OK")
</pallas_src>

<mosaic_0001>
module attributes {stable_mosaic.version = 11 : i64} {
  func.func @_fused_kernel(%arg0: i32, %arg1: memref<1x4x256xf32, #tpu.memory_space<vmem>>, %arg2: memref<4x4xf32, #tpu.memory_space<vmem>>, %arg3: memref<4x1xf32, #tpu.memory_space<vmem>>, %arg4: memref<1x4x256xf32, #tpu.memory_space<vmem>>) attributes {dimension_semantics = [#tpu.dimension_semantics<parallel>], iteration_bounds = array<i64: 2>, scalar_prefetch = 0 : i64, scratch_operands = 0 : i64, tpu.core_type = #tpu.core_type<tc>, window_params = [{transform_indices = @transform_0, window_bounds = array<i64: 1, 4, 256>}, {pipeline_mode = #tpu.pipeline_mode<synchronous>, transform_indices = @transform_1, window_bounds = array<i64: 4, 4>}, {pipeline_mode = #tpu.pipeline_mode<synchronous>, transform_indices = @transform_2, window_bounds = array<i64: 4, 1>}, {transform_indices = @transform_3, window_bounds = array<i64: 1, 4, 256>}]} {
    %c0 = arith.constant 0 : index
    %c0_0 = arith.constant 0 : index
    %c0_1 = arith.constant 0 : index
    %0 = vector.load %arg1[%c0, %c0_0, %c0_1] : memref<1x4x256xf32, #tpu.memory_space<vmem>>, vector<1x4x256xf32>
    %1 = vector.shape_cast %0 : vector<1x4x256xf32> to vector<4x256xf32>
    %c0_2 = arith.constant 0 : index
    %c0_3 = arith.constant 0 : index
    %2 = vector.load %arg2[%c0_2, %c0_3] : memref<4x4xf32, #tpu.memory_space<vmem>>, vector<4x4xf32>
    %cst = arith.constant dense<0.000000e+00> : vector<4xf32>
    %3 = vector.multi_reduction <add>, %1, %cst [1] : vector<4x256xf32> to vector<4xf32>
    %4 = vector.shape_cast %3 : vector<4xf32> to vector<4x1xf32>
    %cst_4 = arith.constant 2.560000e+02 : f32
    %5 = vector.broadcast %cst_4 : f32 to vector<4x1xf32>
    %6 = arith.divf %4, %5 : vector<4x1xf32>
    %c0_5 = arith.constant 0 : index
    %c0_6 = arith.constant 0 : index
    %7 = vector.load %arg3[%c0_5, %c0_6] : memref<4x1xf32, #tpu.memory_space<vmem>>, vector<4x1xf32>
    %8 = arith.addf %7, %6 : vector<4x1xf32>
    %9 = vector.extract_strided_slice %2 {offsets = [0, 0], sizes = [4, 1], strides = [1, 1]} : vector<4x4xf32> to vector<4x1xf32>
    %10 = vector.extract_strided_slice %6 {offsets = [0, 0], sizes = [1, 1], strides = [1, 1]} : vector<4x1xf32> to vector<1x1xf32>
    %11 = vector.broadcast %10 : vector<1x1xf32> to vector<4x1xf32>
    %12 = arith.mulf %9, %11 : vector<4x1xf32>
    %13 = vector.extract_strided_slice %2 {offsets = [0, 1], sizes = [4, 1], strides = [1, 1]} : vector<4x4xf32> to vector<4x1xf32>
    %14 = vector.extract_strided_slice %6 {offsets = [1, 0], sizes = [1, 1], strides = [1, 1]} : vector<4x1xf32> to vector<1x1xf32>
    %15 = vector.broadcast %14 : vector<1x1xf32> to vector<4x1xf32>
    %16 = arith.mulf %13, %15 : vector<4x1xf32>
    %17 = arith.addf %12, %16 : vector<4x1xf32>
    %18 = vector.extract_strided_slice %2 {offsets = [0, 2], sizes = [4, 1], strides = [1, 1]} : vector<4x4xf32> to vector<4x1xf32>
    %19 = vector.extract_strided_slice %6 {offsets = [2, 0], sizes = [1, 1], strides = [1, 1]} : vector<4x1xf32> to vector<1x1xf32>
    %20 = vector.broadcast %19 : vector<1x1xf32> to vector<4x1xf32>
    %21 = arith.mulf %18, %20 : vector<4x1xf32>
    %22 = arith.addf %17, %21 : vector<4x1xf32>
    %23 = vector.extract_strided_slice %2 {offsets = [0, 3], sizes = [4, 1], strides = [1, 1]} : vector<4x4xf32> to vector<4x1xf32>
    %24 = vector.extract_strided_slice %6 {offsets = [3, 0], sizes = [1, 1], strides = [1, 1]} : vector<4x1xf32> to vector<1x1xf32>
    %25 = vector.broadcast %24 : vector<1x1xf32> to vector<4x1xf32>
    %26 = arith.mulf %23, %25 : vector<4x1xf32>
    %27 = arith.addf %22, %26 : vector<4x1xf32>
    %28 = arith.subf %8, %27 : vector<4x1xf32>
    %29 = vector.extract_strided_slice %2 {offsets = [0, 0], sizes = [4, 1], strides = [1, 1]} : vector<4x4xf32> to vector<4x1xf32>
    %30 = vector.extract_strided_slice %1 {offsets = [0, 0], sizes = [1, 256], strides = [1, 1]} : vector<4x256xf32> to vector<1x256xf32>
    %31 = vector.broadcast %29 : vector<4x1xf32> to vector<4x256xf32>
    %32 = vector.broadcast %30 : vector<1x256xf32> to vector<4x256xf32>
    %33 = arith.mulf %31, %32 : vector<4x256xf32>
    %34 = vector.extract_strided_slice %2 {offsets = [0, 1], sizes = [4, 1], strides = [1, 1]} : vector<4x4xf32> to vector<4x1xf32>
    %35 = vector.extract_strided_slice %1 {offsets = [1, 0], sizes = [1, 256], strides = [1, 1]} : vector<4x256xf32> to vector<1x256xf32>
    %36 = vector.broadcast %34 : vector<4x1xf32> to vector<4x256xf32>
    %37 = vector.broadcast %35 : vector<1x256xf32> to vector<4x256xf32>
    %38 = arith.mulf %36, %37 : vector<4x256xf32>
    %39 = arith.addf %33, %38 : vector<4x256xf32>
    %40 = vector.extract_strided_slice %2 {offsets = [0, 2], sizes = [4, 1], strides = [1, 1]} : vector<4x4xf32> to vector<4x1xf32>
    %41 = vector.extract_strided_slice %1 {offsets = [2, 0], sizes = [1, 256], strides = [1, 1]} : vector<4x256xf32> to vector<1x256xf32>
    %42 = vector.broadcast %40 : vector<4x1xf32> to vector<4x256xf32>
    %43 = vector.broadcast %41 : vector<1x256xf32> to vector<4x256xf32>
    %44 = arith.mulf %42, %43 : vector<4x256xf32>
    %45 = arith.addf %39, %44 : vector<4x256xf32>
    %46 = vector.extract_strided_slice %2 {offsets = [0, 3], sizes = [4, 1], strides = [1, 1]} : vector<4x4xf32> to vector<4x1xf32>
    %47 = vector.extract_strided_slice %1 {offsets = [3, 0], sizes = [1, 256], strides = [1, 1]} : vector<4x256xf32> to vector<1x256xf32>
    %48 = vector.broadcast %46 : vector<4x1xf32> to vector<4x256xf32>
    %49 = vector.broadcast %47 : vector<1x256xf32> to vector<4x256xf32>
    %50 = arith.mulf %48, %49 : vector<4x256xf32>
    %51 = arith.addf %45, %50 : vector<4x256xf32>
    %52 = vector.broadcast %28 : vector<4x1xf32> to vector<4x256xf32>
    %53 = arith.addf %51, %52 : vector<4x256xf32>
    %c0_7 = arith.constant 0 : index
    %c0_8 = arith.constant 0 : index
    %c0_9 = arith.constant 0 : index
    %54 = vector.load %arg4[%c0_7, %c0_8, %c0_9] : memref<1x4x256xf32, #tpu.memory_space<vmem>>, vector<1x4x256xf32>
    %55 = vector.shape_cast %54 : vector<1x4x256xf32> to vector<4x256xf32>
    %56 = vector.shape_cast %53 : vector<4x256xf32> to vector<1x4x256xf32>
    tpu.vector_store %arg4[%c0_7, %c0_8, %c0_9], %56 {strides = array<i32>} : memref<1x4x256xf32, #tpu.memory_space<vmem>>, vector<1x4x256xf32>,
    return
  }
  func.func @transform_0(%arg0: i32) -> (i32, i32, i32) {
    %c0_i32 = arith.constant 0 : i32
    %c0_i32_0 = arith.constant 0 : i32
    %c0_i32_1 = arith.constant 0 : i32
    return %arg0, %c0_i32, %c0_i32_0 : i32, i32, i32
  }
  func.func @transform_1(%arg0: i32) -> (i32, i32) {
    %c0_i32 = arith.constant 0 : i32
    %c0_i32_0 = arith.constant 0 : i32
    %c0_i32_1 = arith.constant 0 : i32
    return %c0_i32, %c0_i32_0 : i32, i32
  }
  func.func @transform_2(%arg0: i32) -> (i32, i32) {
    %c0_i32 = arith.constant 0 : i32
    %c0_i32_0 = arith.constant 0 : i32
    %c0_i32_1 = arith.constant 0 : i32
    return %c0_i32, %c0_i32_0 : i32, i32
  }
  func.func @transform_3(%arg0: i32) -> (i32, i32, i32) {
    %c0_i32 = arith.constant 0 : i32
    %c0_i32_0 = arith.constant 0 : i32
    %c0_i32_1 = arith.constant 0 : i32
    return %arg0, %c0_i32, %c0_i32_0 : i32, i32, i32
  }
}

</mosaic_0001>

<llo_original>
// kernel: tpu_custom_call.1
$region0: #{tpu_custom_call.1}
  #allocation0 [shape = 'u32[]', space=smem, size = 0x4, offset = 0x4, fixed_abs, tag = 'smem constant byte address 0x4 - core index']
  #allocation1 [shape = 'u32[144,128]{1,0:T(1,128)}', space=vmem, size = 0x12000, scoped, tag = 'internal scratch']
  %s0 = inlined_call_operand.hbm [shape: f32[2,4,256], index: 0, kind: input, shape index: {}]
  %s1 = inlined_call_operand.vmem [shape: f32[4,4], index: 1, kind: input, shape index: {}]
  %s2 = inlined_call_operand.vmem [shape: f32[4,1], index: 2, kind: input, shape index: {}]
  %s3 = inlined_call_operand.hbm [shape: f32[2,4,256], index: 3, kind: output, shape index: {}]
  %s4 = sld [smem:[#allocation0]]
  $region49: #{tpu_custom_call.1} parent=0
    _
  %s6 = ssub.s32 1, %s4
  %s7 = scalar_select 0, %s6, %s4
  $region1: #{tpu_custom_call.1} parent=0
    #allocation2 [shape = 'u8[8192]{0}', space=vmem, size = 0x2000, scoped, tag = 'input window, operand 0']
    #allocation3 [shape = 's32[2]{0}', space=sflag, size = 0x8, scoped, tag = 'scoped memory for tpu_custom_call.1']
    #allocation4 [shape = 's32[2]{0}', space=sflag, size = 0x8, scoped, tag = 'scoped memory for tpu_custom_call.1']
    #allocation5 [shape = 'u8[8192]{0}', space=vmem, size = 0x2000, scoped, tag = 'output window, operand 0']
    %8 = vsyncpa [#allocation3], 0
    %s9 = scalar_lea.sflag [#allocation3], 1
    %10 = vsyncpa %s9, 0
    %11 = vsyncpa [#allocation4], 0
    %s12 = scalar_lea.sflag [#allocation4], 1
    %13 = vsyncpa %s12, 0
    loop: start=0, step=1, limit=4
    $region2: #{tpu_custom_call.1} parent=1 // loop_pre_header
      _
    $region3: #{tpu_custom_call.1} parent=1 // loop_header
      %s15 = sphi 0, %s19
      %p16 = scmp.ge.s32.totalorder %s15, 4
      %s25 = sphi 0, %s27
      %s28 = sphi 0, %s25
      %s29 = sphi 0, %s28
      %s45 = sphi 0, %s29
      %s49 = sphi 0, %s49
      %s51 = sphi 0, %s49
      %s52 = sphi 0, %s51
      %s66 = sphi 0, %s52
      %s70 = sphi 0, %s70
      %s72 = sphi 0, %s70
      %s73 = sphi 0, %s72
      %s87 = sphi 0, %s73
      %s93 = sphi 0, %s95
      %s96 = sphi 0, %s93
      %s97 = sphi 0, %s96
      %s113 = sphi 0, %s97
    $region4: #{tpu_custom_call.1} parent=1 // loop_header_branch
      %18 = sbr.rel (%p16) target = $region8
    $region5: #{tpu_custom_call.1} parent=1 // loop_body
      %s20 = ssub.s32 %s15, 1
      %s21 = ssub.s32 %s15, 2
      %s22 = sadd.s32 %s15, 1
      %s23 = ssub.s32 %s15, %s22
      %p24 = scmp.eq.s32.totalorder %s23, 0
      %s26 = sadd.s32 %s25, 1
      %s27 = scalar_select %p24, %s25, %s26
      %p30 = pneg %p24
      %p31 = scmp.eq.s32.totalorder %s15, 1
      %p32 = por %p30, %p31
      %p33 = scmp.ne.s32.totalorder %s25, %s28
      %p34 = scmp.eq.s32.totalorder %s15, 0
      %p35 = por %p33, %p34
      %p36 = scmp.ne.s32.totalorder %s25, %s28
      %p37 = scmp.eq.s32.totalorder %s20, 1
      %p38 = por %p36, %p37
      %p39 = scmp.ne.s32.totalorder %s28, %s29
      %p40 = scmp.eq.s32.totalorder %s20, 0
      %p41 = por %p39, %p40
      %p42 = scmp.ne.s32.totalorder %s28, %s29
      %p43 = scmp.eq.s32.totalorder %s21, 1
      %p44 = por %p42, %p43
      %p46 = scmp.ne.s32.totalorder %s29, %s45
      %p47 = scmp.eq.s32.totalorder %s21, 0
      %p48 = por %p46, %p47
      %s50 = sadd.s32 %s49, 1
      %p53 = scmp.eq.s32.totalorder %s15, 1
      %p54 = scmp.ne.s32.totalorder %s49, %s51
      %p55 = scmp.eq.s32.totalorder %s15, 0
      %p56 = por %p54, %p55
      %p57 = scmp.ne.s32.totalorder %s49, %s51
      %p58 = scmp.eq.s32.totalorder %s20, 1
      %p59 = por %p57, %p58
      %p60 = scmp.ne.s32.totalorder %s51, %s52
      %p61 = scmp.eq.s32.totalorder %s20, 0
      %p62 = por %p60, %p61
      %p63 = scmp.ne.s32.totalorder %s51, %s52
      %p64 = scmp.eq.s32.totalorder %s21, 1
      %p65 = por %p63, %p64
      %p67 = scmp.ne.s32.totalorder %s52, %s66
      %p68 = scmp.eq.s32.totalorder %s21, 0
      %p69 = por %p67, %p68
      %s71 = sadd.s32 %s70, 1
      %p74 = scmp.eq.s32.totalorder %s15, 1
      %p75 = scmp.ne.s32.totalorder %s70, %s72
      %p76 = scmp.eq.s32.totalorder %s15, 0
      %p77 = por %p75, %p76
      %p78 = scmp.ne.s32.totalorder %s70, %s72
      %p79 = scmp.eq.s32.totalorder %s20, 1
      %p80 = por %p78, %p79
      %p81 = scmp.ne.s32.totalorder %s72, %s73
      %p82 = scmp.eq.s32.totalorder %s20, 0
      %p83 = por %p81, %p82
      %p84 = scmp.ne.s32.totalorder %s72, %s73
      %p85 = scmp.eq.s32.totalorder %s21, 1
      %p86 = por %p84, %p85
      %p88 = scmp.ne.s32.totalorder %s73, %s87
      %p89 = scmp.eq.s32.totalorder %s21, 0
      %p90 = por %p88, %p89
      %s91 = ssub.s32 %s15, %s22
      %p92 = scmp.eq.s32.totalorder %s91, 0
      %s94 = sadd.s32 %s93, 1
      %s95 = scalar_select %p92, %s93, %s94
      %p98 = pneg %p92
      %p99 = scmp.eq.s32.totalorder %s15, 1
      %p100 = por %p98, %p99
      %p101 = scmp.ne.s32.totalorder %s93, %s96
      %p102 = scmp.eq.s32.totalorder %s15, 0
      %p103 = por %p101, %p102
      %p104 = scmp.ne.s32.totalorder %s93, %s96
      %p105 = scmp.eq.s32.totalorder %s20, 1
      %p106 = por %p104, %p105
      %p107 = scmp.ne.s32.totalorder %s96, %s97
      %p108 = scmp.eq.s32.totalorder %s20, 0
      %p109 = por %p107, %p108
      %p110 = scmp.ne.s32.totalorder %s96, %s97
      %p111 = scmp.eq.s32.totalorder %s21, 1
      %p112 = por %p110, %p111
      %p114 = scmp.ne.s32.totalorder %s97, %s113
      %p115 = scmp.eq.s32.totalorder %s21, 0
      %p116 = por %p114, %p115
      %p117 = scmp.le.s32.totalorder 1, %s15
      %p118 = scmp.lt.s32.totalorder %s15, 3
      %p119 = pnand %p117, %p118
      %p120 = pneg %p119
      // Predicated region
      $region9: #{tpu_custom_call.1} parent=5 // pred_check
        _
      $region10: #{tpu_custom_call.1} parent=5 // pred_check_branch
        %122 = sbr.rel (%p119) target = $region12
      $region11: #{tpu_custom_call.1} parent=5 // pred_region
        %s123 = ssub.s32 %s15, 1
        // Predicated region
        $region13: #{tpu_custom_call.1} parent=11 // pred_check
          %p124 = pneg %p62
        $region14: #{tpu_custom_call.1} parent=11 // pred_check_branch
          %126 = sbr.rel (%p124) target = $region16
        $region15: #{tpu_custom_call.1} parent=11 // pred_region
          _
        $region16: #{tpu_custom_call.1} parent=11 // pred_fallthru
          _
        // Predicated region
        $region17: #{tpu_custom_call.1} parent=11 // pred_check
          %p127 = pneg %p83
        $region18: #{tpu_custom_call.1} parent=11 // pred_check_branch
          %129 = sbr.rel (%p127) target = $region20
        $region19: #{tpu_custom_call.1} parent=11 // pred_region
          _
        $region20: #{tpu_custom_call.1} parent=11 // pred_fallthru
          _
      $region12: #{tpu_custom_call.1} parent=5 // pred_fallthru
        _
      %p130 = scmp.lt.s32.totalorder %s15, 2
      // Predicated region
      $region21: #{tpu_custom_call.1} parent=5 // pred_check
        %p131 = pneg %p130
      $region22: #{tpu_custom_call.1} parent=5 // pred_check_branch
        %133 = sbr.rel (%p131) target = $region24
      $region23: #{tpu_custom_call.1} parent=5 // pred_region
        // Predicated region
        $region25: #{tpu_custom_call.1} parent=23 // pred_check
          %p134 = pneg %p35
        $region26: #{tpu_custom_call.1} parent=23 // pred_check_branch
          %136 = sbr.rel (%p134) target = $region28
        $region27: #{tpu_custom_call.1} parent=23 // pred_region
          %s137 = sand.u32 %s25, 1
          %s138 = scalar_lea.sflag [#allocation3], %s137
          %s139 = sand.u32 %s25, 1
          %s140 = smul.addr %s139, 8
          %s141 = scalar_lea.vmem [#allocation2], %s140
          %s143 = ssub.s32 128, 128
          %144 = vsyncadd %s138, %s143
          %s145 = smul.addr %s15, 2
          %s146 = smul.addr %s145, 64
          %s147 = scalar_lea.hbm %s0, %s146
          %s149 = sshll.u32 %s141, 4
          %s150 = int_to_ptr.vmem [resolvable:$true] %s149
          %152 = dma.hbm_to_vmem [thread:$0]  %s147, 128, %s150, %s138
        $region28: #{tpu_custom_call.1} parent=23 // pred_fallthru
          _
      $region24: #{tpu_custom_call.1} parent=5 // pred_fallthru
        _
      %p153 = scmp.le.s32.totalorder 1, %s15
      %p154 = scmp.lt.s32.totalorder %s15, 3
      %p155 = pnand %p153, %p154
      %p156 = pneg %p155
      // Predicated region
      $region29: #{tpu_custom_call.1} parent=5 // pred_check
        _
      $region30: #{tpu_custom_call.1} parent=5 // pred_check_branch
        %158 = sbr.rel (%p155) target = $region32
      $region31: #{tpu_custom_call.1} parent=5 // pred_region
        %s159 = ssub.s32 %s15, 1
        %s160 = sand.u32 %s28, 1
        %s161 = scalar_lea.sflag [#allocation3], %s160
        %s162 = sand.u32 %s28, 1
        %s163 = smul.addr %s162, 8
        %s164 = scalar_lea.vmem [#allocation2], %s163
        // Predicated region
        $region33: #{tpu_custom_call.1} parent=31 // pred_check
          %p165 = pneg %p41
        $region34: #{tpu_custom_call.1} parent=31 // pred_check_branch
          %167 = sbr.rel (%p165) target = $region36
        $region35: #{tpu_custom_call.1} parent=31 // pred_region
          %168 = dma.done %s161, 128
        $region36: #{tpu_custom_call.1} parent=31 // pred_fallthru
          _
        %s169 = sand.u32 %s28, 1
        %s170 = scalar_lea.sflag [#allocation3], %s169
        %s171 = sand.u32 %s28, 1
        %s172 = smul.addr %s171, 8
        %s173 = scalar_lea.vmem [#allocation2], %s172
        %p174 = pneg %p41
        %p175 = pneg %p38
        %p176 = pneg %p62
        %p177 = pneg %p59
        %p178 = pneg %p83
        %p179 = pneg %p80
        %p180 = pneg %p109
        %p181 = pneg %p106
        %s182 = sand.u32 %s96, 1
        %s183 = scalar_lea.sflag [#allocation4], %s182
        %s184 = sand.u32 %s96, 1
        %s185 = smul.addr %s184, 8
        %s186 = scalar_lea.vmem [#allocation5], %s185
        %v187 = vld [vmem:[%s164] sm:$0xff]
        %v188 = vld [vmem:[%s1] sm:$0xf]
        %v190 = vcombine.high %v187, %v187
        %vm192 = vcmask 1043456
        %v193 = vsel %vm192, %v187, 0.0
        %v194 = vsel %vm192, %v190, 0.0
        %v195 = vadd.f32 %v193, %v194
        %196 = vadd.xlane.f32.xlu0 %v195
        %v197 = vpop.xlane.xlu0 %196
        %v198 = vrcp.pop 256.0
        %v199 = vmul.f32 %v197, %v198
        %v200 = vld [vmem:[%s2] sm:$0xf]
        %v201 = vadd.f32 %v200, %v199
        %v202 = vlaneseq
        %v203 = vshrl.u32 %v202, 7
        %v204 = vsub.s32 0, %v203
        %v205 = vrot.slane %v199, %v204
        %v206 = vmul.f32 %v188, %v205
        %v207 = vlaneseq
        %v208 = vshrl.u32 %v207, 7
        %v209 = vsub.s32 1, %v208
        %v210 = vrot.slane %v199, %v209
        %v211 = vmul.f32 %v188, %v210
        %213 = vrot.lane.b32.xlu0 %v211, 127
        %v214 = vpop.permute.xlu0 %213
        %v216 = vadd.f32 %v206, %v214
        %v217 = vlaneseq
        %v218 = vshrl.u32 %v217, 7
        %v219 = vsub.s32 2, %v218
        %v220 = vrot.slane %v199, %v219
        %v221 = vmul.f32 %v188, %v220
        %223 = vrot.lane.b32.xlu0 %v221, 126
        %v224 = vpop.permute.xlu0 %223
        %v226 = vadd.f32 %v216, %v224
        %v227 = vlaneseq
        %v228 = vshrl.u32 %v227, 7
        %v229 = vsub.s32 3, %v228
        %v230 = vrot.slane %v199, %v229
        %v231 = vmul.f32 %v188, %v230
        %233 = vrot.lane.b32.xlu0 %v231, 125
        %v234 = vpop.permute.xlu0 %233
        %v236 = vadd.f32 %v226, %v234
        %v237 = vsub.f32 %v201, %v236
        %239 = vset.pattern.permute.xlu0 0
        %240 = vperm.xlu0 %239, %v188
        %v241 = vpop.permute.xlu0 %240
        %v243 = vlaneseq
        %v244 = vshrl.u32 %v243, 7
        %v245 = vsub.s32 0, %v244
        %v246 = vrot.slane %v187, %v245
        %v247 = vlaneseq
        %v248 = vshrl.u32 %v247, 7
        %v249 = vsub.s32 4, %v248
        %v250 = vrot.slane %v187, %v249
        %v253 = vlaneseq
        %v254 = vshrl.u32 %v253, 7
        %v255 = vsub.s32 0, %v254
        %v256 = vrot.slane %v246, %v255
        %v257 = vlaneseq
        %v258 = vshrl.u32 %v257, 7
        %v259 = vsub.s32 0, %v258
        %v260 = vrot.slane %v250, %v259
        %v261 = vmul.f32 %v241, %v256
        %v262 = vmul.f32 %v241, %v260
        %263 = vset.pattern.permute.xlu0 1
        %264 = vperm.xlu0 %263, %v188
        %v265 = vpop.permute.xlu0 %264
        %v267 = vlaneseq
        %v268 = vshrl.u32 %v267, 7
        %v269 = vsub.s32 1, %v268
        %v270 = vrot.slane %v187, %v269
        %v271 = vlaneseq
        %v272 = vshrl.u32 %v271, 7
        %v273 = vsub.s32 5, %v272
        %v274 = vrot.slane %v187, %v273
        %v277 = vlaneseq
        %v278 = vshrl.u32 %v277, 7
        %v279 = vsub.s32 1, %v278
        %v280 = vrot.slane %v270, %v279
        %v281 = vlaneseq
        %v282 = vshrl.u32 %v281, 7
        %v283 = vsub.s32 1, %v282
        %v284 = vrot.slane %v274, %v283
        %v285 = vmul.f32 %v265, %v280
        %v286 = vmul.f32 %v265, %v284
        %v287 = vadd.f32 %v261, %v285
        %v288 = vadd.f32 %v262, %v286
        %289 = vset.pattern.permute.xlu0 2
        %290 = vperm.xlu0 %289, %v188
        %v291 = vpop.permute.xlu0 %290
        %v293 = vlaneseq
        %v294 = vshrl.u32 %v293, 7
        %v295 = vsub.s32 2, %v294
        %v296 = vrot.slane %v187, %v295
        %v297 = vlaneseq
        %v298 = vshrl.u32 %v297, 7
        %v299 = vsub.s32 6, %v298
        %v300 = vrot.slane %v187, %v299
        %v303 = vlaneseq
        %v304 = vshrl.u32 %v303, 7
        %v305 = vsub.s32 2, %v304
        %v306 = vrot.slane %v296, %v305
        %v307 = vlaneseq
        %v308 = vshrl.u32 %v307, 7
        %v309 = vsub.s32 2, %v308
        %v310 = vrot.slane %v300, %v309
        %v311 = vmul.f32 %v291, %v306
        %v312 = vmul.f32 %v291, %v310
        %v313 = vadd.f32 %v287, %v311
        %v314 = vadd.f32 %v288, %v312
        %315 = vset.pattern.permute.xlu0 3
        %316 = vperm.xlu0 %315, %v188
        %v317 = vpop.permute.xlu0 %316
        %v319 = vlaneseq
        %v320 = vshrl.u32 %v319, 7
        %v321 = vsub.s32 3, %v320
        %v322 = vrot.slane %v187, %v321
        %v323 = vlaneseq
        %v324 = vshrl.u32 %v323, 7
        %v325 = vsub.s32 7, %v324
        %v326 = vrot.slane %v187, %v325
        %v329 = vlaneseq
        %v330 = vshrl.u32 %v329, 7
        %v331 = vsub.s32 3, %v330
        %v332 = vrot.slane %v322, %v331
        %v333 = vlaneseq
        %v334 = vshrl.u32 %v333, 7
        %v335 = vsub.s32 3, %v334
        %v336 = vrot.slane %v326, %v335
        %v337 = vmul.f32 %v317, %v332
        %v338 = vmul.f32 %v317, %v336
        %v339 = vadd.f32 %v313, %v337
        %v340 = vadd.f32 %v314, %v338
        %342 = vset.pattern.permute.xlu0 0
        %343 = vperm.xlu0 %342, %v237
        %v344 = vpop.permute.xlu0 %343
        %v346 = vadd.f32 %v339, %v344
        %v347 = vadd.f32 %v340, %v344
        %v350 = vcombine.low %v346, %v347
        %352 = vst [vmem:[%s186] sm:$0xff] %v350
        %s353 = sand.u32 %s96, 1
        %s354 = scalar_lea.sflag [#allocation4], %s353
        %s355 = sand.u32 %s96, 1
        %s356 = smul.addr %s355, 8
        %s357 = scalar_lea.vmem [#allocation5], %s356
        // Predicated region
        $region37: #{tpu_custom_call.1} parent=31 // pred_check
          %p358 = pneg %p106
        $region38: #{tpu_custom_call.1} parent=31 // pred_check_branch
          %360 = sbr.rel (%p358) target = $region40
        $region39: #{tpu_custom_call.1} parent=31 // pred_region
          %s362 = ssub.s32 128, 128
          %363 = vsyncadd %s354, %s362
          %s364 = smul.addr %s20, 2
          %s365 = smul.addr %s364, 64
          %s366 = scalar_lea.hbm %s3, %s365
          %s368 = sshll.u32 %s357, 4
          %s369 = int_to_ptr.vmem [resolvable:$true] %s368
          %371 = dma.vmem_to_hbm [thread:$0]  %s369, 128, %s366, %s354
        $region40: #{tpu_custom_call.1} parent=31 // pred_fallthru
          _
      $region32: #{tpu_custom_call.1} parent=5 // pred_fallthru
        _
      %p372 = scmp.le.s32.totalorder 2, %s15
      // Predicated region
      $region41: #{tpu_custom_call.1} parent=5 // pred_check
        %p373 = pneg %p372
      $region42: #{tpu_custom_call.1} parent=5 // pred_check_branch
        %375 = sbr.rel (%p373) target = $region44
      $region43: #{tpu_custom_call.1} parent=5 // pred_region
        %s376 = ssub.s32 %s15, 2
        // Predicated region
        $region45: #{tpu_custom_call.1} parent=43 // pred_check
          %p377 = pneg %p112
        $region46: #{tpu_custom_call.1} parent=43 // pred_check_branch
          %379 = sbr.rel (%p377) target = $region48
        $region47: #{tpu_custom_call.1} parent=43 // pred_region
          %s380 = sand.u32 %s97, 1
          %s381 = scalar_lea.sflag [#allocation4], %s380
          %s382 = sand.u32 %s97, 1
          %s383 = smul.addr %s382, 8
          %s384 = scalar_lea.vmem [#allocation5], %s383
          %385 = dma.done %s381, 128
        $region48: #{tpu_custom_call.1} parent=43 // pred_fallthru
          _
      $region44: #{tpu_custom_call.1} parent=5 // pred_fallthru
        _
    $region6: #{tpu_custom_call.1} parent=1 // loop_footer
      %s19 = sadd.s32 1, %s15
    $region7: #{tpu_custom_call.1} parent=1 // loop_footer_branch
      %14 = sbr.rel target = $region3
    $region8: #{tpu_custom_call.1} parent=1 // loop_exit
      _
    %386 = vsyncpa [#allocation3], 1
    %s387 = scalar_lea.sflag [#allocation3], 1
    %388 = vsyncpa %s387, 1
    %389 = vsyncpa [#allocation4], 1
    %s390 = scalar_lea.sflag [#allocation4], 1
    %391 = vsyncpa %s390, 1

</llo_original>
